<compile_context>
chip_gen: v6e
topology: v6e:2x2x1
jax: 0.10.0
libtpu: 0.0.40
codegen_flags: <defaults>
</compile_context>

<pallas_src>
import jax
import jax.numpy as jnp
from jax.experimental import pallas as pl
from jax.experimental.pallas import tpu as pltpu


def detect_kernel(x_ref, w1_ref, b1_ref, w2_ref, b2_ref, w3_ref, b3_ref,
                  out_ref):
    # x_ref  : (t_eff, C*bt)   bf16  conv1 taps at output t=0, lane = c*bt + b
    # w1_ref : (feat1, t_eff)  bf16  conv1 taps
    # b1_ref : (feat1, 1)      f32
    # w2_ref : (feat2, feat1)  bf16  1x1-conv weights
    # b2_ref : (feat2, 1)      f32
    # w3_ref : (feat2, C*bt)   f32   Linear weight w3[g,c] repeated bt x on lanes
    # b3_ref : (1,)            f32   SMEM scalar
    # out_ref: (1, bt)         f32   sigmoid probabilities (lane-dense)
    bt = out_ref.shape[1]
    cb = x_ref.shape[1]
    C = cb // bt

    # temporal_filter1 at output time 0: one wide matmul, N = C*bt lanes.
    h1 = jnp.dot(w1_ref[...], x_ref[...],
                 preferred_element_type=jnp.float32)        # (feat1, C*bt)
    h1 = jnp.maximum(h1 + b1_ref[...], 0.0)

    # temporal_filter2 (1x1 conv == filter mixing): second wide matmul.
    h2 = jnp.dot(w2_ref[...], h1.astype(jnp.bfloat16),
                 preferred_element_type=jnp.float32)        # (feat2, C*bt)
    h2 = jnp.maximum(h2 + b2_ref[...], 0.0)

    # Linear(feat2*C -> 1) without any relayout:
    #   elementwise weight multiply, sum the C 128-aligned lane blocks
    #   (whole-vreg adds), then reduce the feat2 sublanes (XLU).
    hw = h2 * w3_ref[...]                                   # (feat2, C*bt)
    s = hw[:, 0:bt]
    for c in range(1, C):                                   # static, unrolled
        s = s + hw[:, c * bt:(c + 1) * bt]                  # (feat2, bt)
    logit = jnp.sum(s, axis=0, keepdims=True) + b3_ref[0]   # (1, bt)
    out_ref[...] = jax.nn.sigmoid(logit).astype(out_ref.dtype)


def prepare_params(params, *, spike_size, T):
    """One-time, per-parameter-set relayout into kernel-ready arrays."""
    w1, b1, w2, b2, w3, b3 = params
    feat1 = w1.shape[0]
    feat2 = w2.shape[0]
    pad = (spike_size - 1) // 2
    # conv1 taps that overlap the (zero-padded) input at output time 0:
    #   out1[b,f,0,c] = b1[f] + sum_{t<t_eff} x[b,t,c] * W1[f,0,pad+t,0]
    t_eff = min(T, spike_size - pad)
    n_neigh = w3.shape[1] // feat2

    w1_k = w1[:, 0, pad:pad + t_eff, 0].astype(jnp.bfloat16)    # (feat1, t_eff)
    w2_k = w2[:, :, 0, 0].astype(jnp.bfloat16)                  # (feat2, feat1)
    # PyTorch flattening of (B, feat2, C) is g*C + c.
    w3_gc = w3.reshape(feat2, n_neigh).astype(jnp.float32)      # (feat2, C)
    return dict(
        w1_k=w1_k,
        b1=b1.reshape(feat1, 1).astype(jnp.float32),
        w2_k=w2_k,
        b2=b2.reshape(feat2, 1).astype(jnp.float32),
        w3_gc=w3_gc,
        b3=b3.reshape(1).astype(jnp.float32),
        t_eff=t_eff,
    )


def detect_forward(x, params=None, *, spike_size, bt=None, prepared=None):
    """x: (B, T, C) float32 (batch, time, neighbor channel), as fed to the
    PyTorch module before its internal unsqueeze.  Returns (B, 1) float32."""
    B, T, C = x.shape
    if prepared is None:
        prepared = prepare_params(params, spike_size=spike_size, T=T)
    t_eff = prepared["t_eff"]
    w1_k, b1_2d = prepared["w1_k"], prepared["b1"]
    w2_k, b2_2d = prepared["w2_k"], prepared["b2"]
    w3_gc, b3_1d = prepared["w3_gc"], prepared["b3"]
    feat1 = w1_k.shape[0]
    feat2 = w2_k.shape[0]
    assert w3_gc.shape == (feat2, C)

    # ---- lane-tile selection: lane-dense (>=128), >=2 grid steps at large B
    LANE = 128
    B_pad = ((B + LANE - 1) // LANE) * LANE
    if bt is None:
        bt = B_pad if B_pad <= 4096 else 4096
    assert bt % LANE == 0
    B_pad = ((B_pad + bt - 1) // bt) * bt
    n_blk = B_pad // bt

    # ---- one-time layout plumbing: batch onto lanes, (c, b) flat per block
    x_t = x[:, :t_eff, :]
    if B_pad != B:
        x_t = jnp.pad(x_t, ((0, B_pad - B), (0, 0), (0, 0)))
    # (B_pad, t_eff, C) -> (n_blk, bt, t_eff, C) -> (n_blk, t_eff, C, bt)
    x_blk = jnp.transpose(x_t.reshape(n_blk, bt, t_eff, C), (0, 2, 3, 1))
    x_blk = x_blk.reshape(n_blk, t_eff, C * bt).astype(jnp.bfloat16)
    # TODO(synk): have the producer emit x in this (t, c, b) layout (or use
    # allow_input_fusion) to kill the standalone transpose+cast HBM pass.

    # w3_tile[g, c*bt + b] = w3[g, c]
    w3_tile = jnp.repeat(w3_gc, bt, axis=1)                     # (feat2, C*bt)

    cost = pl.CostEstimate(
        flops=2 * B_pad * C * (t_eff * feat1 + feat1 * feat2 + feat2),
        transcendentals=B_pad,
        bytes_accessed=int(x_blk.size) * 2 + B_pad * 4
        + int(w3_tile.size) * 4 + 2048,
    )

    out = pl.pallas_call(
        detect_kernel,
        out_shape=jax.ShapeDtypeStruct((1, B_pad), jnp.float32),
        grid=(n_blk,),
        in_specs=[
            pl.BlockSpec((None, t_eff, C * bt), lambda i: (i, 0, 0)),
            pl.BlockSpec((feat1, t_eff), lambda i: (0, 0)),
            pl.BlockSpec((feat1, 1), lambda i: (0, 0)),
            pl.BlockSpec((feat2, feat1), lambda i: (0, 0)),
            pl.BlockSpec((feat2, 1), lambda i: (0, 0)),
            pl.BlockSpec((feat2, C * bt), lambda i: (0, 0)),
            pl.BlockSpec(memory_space=pltpu.MemorySpace.SMEM),
        ],
        out_specs=pl.BlockSpec((1, bt), lambda i: (0, i)),
        compiler_params=pltpu.CompilerParams(
            dimension_semantics=("parallel",),
            vmem_limit_bytes=32 << 20),
        cost_estimate=cost,
    )(x_blk, w1_k, b1_2d, w2_k, b2_2d, w3_tile, b3_1d)
    return out[0, :B].reshape(B, 1)


def detect_reference(x, params, *, spike_size):
    """Pure-JAX reference reproducing the full PyTorch forward (NCHW convs)."""
    w1, b1, w2, b2, w3, b3 = params
    pad = (spike_size - 1) // 2
    xin = x[:, None]                                              # (B, 1, T, C)
    h = jax.lax.conv_general_dilated(
        xin, w1, window_strides=(1, 1), padding=((pad, pad), (0, 0)),
        dimension_numbers=("NCHW", "OIHW", "NCHW"),
        precision=jax.lax.Precision.HIGHEST)
    h = jax.nn.relu(h + b1[None, :, None, None])
    h = jax.lax.conv_general_dilated(
        h, w2, window_strides=(1, 1), padding=((0, 0), (0, 0)),
        dimension_numbers=("NCHW", "OIHW", "NCHW"),
        precision=jax.lax.Precision.HIGHEST)
    h = jax.nn.relu(h + b2[None, :, None, None])
    h = h[:, :, 0]                                                # (B, feat2, C)
    h = h.reshape(h.shape[0], -1)
    logit = jnp.dot(h, w3.T, precision=jax.lax.Precision.HIGHEST) + b3[None, :]
    return jax.nn.sigmoid(logit)


if __name__ == "__main__":
    key = jax.random.PRNGKey(0)

    # Small shapes consistent with the module (spike_size must be odd).
    spike_size = 31
    n_neigh = 7
    n_filters = [16, 8, 8]
    B = 16
    feat1, feat2, _ = n_filters

    # channel_index is only used for its second dim (n_neigh) in __init__;
    # forward() never reads it, so a dummy suffices.
    channel_index = jnp.tile(jnp.arange(n_neigh, dtype=jnp.int32)[None, :],
                             (12, 1))
    assert channel_index.shape[1] == n_neigh

    ks = jax.random.split(key, 8)
    w1 = 0.1 * jax.random.normal(ks[0], (feat1, 1, spike_size, 1), jnp.float32)
    b1 = 0.1 * jax.random.normal(ks[1], (feat1,), jnp.float32)
    w2 = 0.1 * jax.random.normal(ks[2], (feat2, feat1, 1, 1), jnp.float32)
    b2 = 0.1 * jax.random.normal(ks[3], (feat2,), jnp.float32)
    w3 = 0.1 * jax.random.normal(ks[4], (1, feat2 * n_neigh), jnp.float32)
    b3 = 0.1 * jax.random.normal(ks[5], (1,), jnp.float32)
    params = (w1, b1, w2, b2, w3, b3)

    # Hoisted once per parameter set (perf review: avoid per-call relayout).
    prepared = prepare_params(params, spike_size=spike_size, T=spike_size)

    # --- case 1: tiny batch (padded up to one 128-lane tile) ---
    x = jax.random.normal(ks[6], (B, spike_size, n_neigh), jnp.float32)
    out = detect_forward(x, params, spike_size=spike_size, prepared=prepared)
    out = jax.block_until_ready(out)
    ref = detect_reference(x, params, spike_size=spike_size)
    assert out.shape == (B, 1) and out.dtype == jnp.float32
    assert bool(jnp.allclose(out, ref, atol=5e-3, rtol=0.0)), \
        "Pallas kernel does not match JAX reference (case 1)"

    # --- case 2: non-multiple-of-128 batch, multiple grid steps (bt=128) ---
    B2 = 300
    x2 = jax.random.normal(ks[7], (B2, spike_size, n_neigh), jnp.float32)
    out2 = detect_forward(x2, params, spike_size=spike_size, bt=128,
                          prepared=prepared)
    out2 = jax.block_until_ready(out2)
    ref2 = detect_reference(x2, params, spike_size=spike_size)
    assert out2.shape == (B2, 1) and out2.dtype == jnp.float32
    assert bool(jnp.allclose(out2, ref2, atol=5e-3, rtol=0.0)), \
        "Pallas kernel does not match JAX reference (case 2)"

    print("KERNEL_OK")
</pallas_src>

<mosaic_0001>
module attributes {stable_mosaic.version = 11 : i64} {
  func.func @detect_kernel(%arg0: i32, %arg1: memref<1x16x896xbf16, #tpu.memory_space<vmem>>, %arg2: memref<16x16xbf16, #tpu.memory_space<vmem>>, %arg3: memref<16x1xf32, #tpu.memory_space<vmem>>, %arg4: memref<8x16xbf16, #tpu.memory_space<vmem>>, %arg5: memref<8x1xf32, #tpu.memory_space<vmem>>, %arg6: memref<8x896xf32, #tpu.memory_space<vmem>>, %arg7: memref<1xf32, #tpu.memory_space<smem>>, %arg8: memref<1x128xf32, #tpu.memory_space<vmem>>) attributes {dimension_semantics = [#tpu.dimension_semantics<parallel>], iteration_bounds = array<i64: 1>, scalar_prefetch = 0 : i64, scratch_operands = 0 : i64, tpu.core_type = #tpu.core_type<tc>, window_params = [{transform_indices = @transform_0, window_bounds = array<i64: 1, 16, 896>}, {pipeline_mode = #tpu.pipeline_mode<synchronous>, transform_indices = @transform_1, window_bounds = array<i64: 16, 16>}, {pipeline_mode = #tpu.pipeline_mode<synchronous>, transform_indices = @transform_2, window_bounds = array<i64: 16, 1>}, {pipeline_mode = #tpu.pipeline_mode<synchronous>, transform_indices = @transform_3, window_bounds = array<i64: 8, 16>}, {pipeline_mode = #tpu.pipeline_mode<synchronous>, transform_indices = @transform_4, window_bounds = array<i64: 8, 1>}, {pipeline_mode = #tpu.pipeline_mode<synchronous>, transform_indices = @transform_5, window_bounds = array<i64: 8, 896>}, {transform_indices = @transform_6, window_bounds = array<i64: 1>}, {transform_indices = @transform_7, window_bounds = array<i64: 1, 128>}]} {
    %c0 = arith.constant 0 : index
    %c0_0 = arith.constant 0 : index
    %0 = vector.load %arg2[%c0, %c0_0] : memref<16x16xbf16, #tpu.memory_space<vmem>>, vector<16x16xbf16>
    %c0_1 = arith.constant 0 : index
    %c0_2 = arith.constant 0 : index
    %c0_3 = arith.constant 0 : index
    %1 = vector.load %arg1[%c0_1, %c0_2, %c0_3] : memref<1x16x896xbf16, #tpu.memory_space<vmem>>, vector<1x16x896xbf16>
    %2 = vector.shape_cast %1 : vector<1x16x896xbf16> to vector<16x896xbf16>
    %cst = arith.constant dense<0.000000e+00> : vector<16x896xf32>
    %3 = tpu.matmul %0, %2, %cst {dimension_numbers = #tpu.dot_dimension_numbers<[1], [0], [0], [1], [0, 0, 1, 1], [], []>} : vector<16x16xbf16>, vector<16x896xbf16>, vector<16x896xf32> -> vector<16x896xf32>
    %c0_4 = arith.constant 0 : index
    %c0_5 = arith.constant 0 : index
    %4 = vector.load %arg3[%c0_4, %c0_5] : memref<16x1xf32, #tpu.memory_space<vmem>>, vector<16x1xf32>
    %5 = vector.broadcast %4 : vector<16x1xf32> to vector<16x896xf32>
    %6 = arith.addf %3, %5 : vector<16x896xf32>
    %cst_6 = arith.constant 0.000000e+00 : f32
    %7 = vector.broadcast %cst_6 : f32 to vector<16x896xf32>
    %8 = arith.maximumf %6, %7 : vector<16x896xf32>
    %c0_7 = arith.constant 0 : index
    %c0_8 = arith.constant 0 : index
    %9 = vector.load %arg4[%c0_7, %c0_8] : memref<8x16xbf16, #tpu.memory_space<vmem>>, vector<8x16xbf16>
    %10 = arith.truncf %8 : vector<16x896xf32> to vector<16x896xbf16>
    %cst_9 = arith.constant dense<0.000000e+00> : vector<8x896xf32>
    %11 = tpu.matmul %9, %10, %cst_9 {dimension_numbers = #tpu.dot_dimension_numbers<[1], [0], [0], [1], [0, 0, 1, 1], [], []>} : vector<8x16xbf16>, vector<16x896xbf16>, vector<8x896xf32> -> vector<8x896xf32>
    %c0_10 = arith.constant 0 : index
    %c0_11 = arith.constant 0 : index
    %12 = vector.load %arg5[%c0_10, %c0_11] : memref<8x1xf32, #tpu.memory_space<vmem>>, vector<8x1xf32>
    %13 = vector.broadcast %12 : vector<8x1xf32> to vector<8x896xf32>
    %14 = arith.addf %11, %13 : vector<8x896xf32>
    %cst_12 = arith.constant 0.000000e+00 : f32
    %15 = vector.broadcast %cst_12 : f32 to vector<8x896xf32>
    %16 = arith.maximumf %14, %15 : vector<8x896xf32>
    %c0_13 = arith.constant 0 : index
    %c0_14 = arith.constant 0 : index
    %17 = vector.load %arg6[%c0_13, %c0_14] : memref<8x896xf32, #tpu.memory_space<vmem>>, vector<8x896xf32>
    %18 = arith.mulf %16, %17 : vector<8x896xf32>
    %19 = vector.extract_strided_slice %18 {offsets = [0, 0], sizes = [8, 128], strides = [1, 1]} : vector<8x896xf32> to vector<8x128xf32>
    %20 = vector.extract_strided_slice %18 {offsets = [0, 128], sizes = [8, 128], strides = [1, 1]} : vector<8x896xf32> to vector<8x128xf32>
    %21 = arith.addf %19, %20 : vector<8x128xf32>
    %22 = vector.extract_strided_slice %18 {offsets = [0, 256], sizes = [8, 128], strides = [1, 1]} : vector<8x896xf32> to vector<8x128xf32>
    %23 = arith.addf %21, %22 : vector<8x128xf32>
    %24 = vector.extract_strided_slice %18 {offsets = [0, 384], sizes = [8, 128], strides = [1, 1]} : vector<8x896xf32> to vector<8x128xf32>
    %25 = arith.addf %23, %24 : vector<8x128xf32>
    %26 = vector.extract_strided_slice %18 {offsets = [0, 512], sizes = [8, 128], strides = [1, 1]} : vector<8x896xf32> to vector<8x128xf32>
    %27 = arith.addf %25, %26 : vector<8x128xf32>
    %28 = vector.extract_strided_slice %18 {offsets = [0, 640], sizes = [8, 128], strides = [1, 1]} : vector<8x896xf32> to vector<8x128xf32>
    %29 = arith.addf %27, %28 : vector<8x128xf32>
    %30 = vector.extract_strided_slice %18 {offsets = [0, 768], sizes = [8, 128], strides = [1, 1]} : vector<8x896xf32> to vector<8x128xf32>
    %31 = arith.addf %29, %30 : vector<8x128xf32>
    %cst_15 = arith.constant dense<0.000000e+00> : vector<128xf32>
    %32 = vector.multi_reduction <add>, %31, %cst_15 [0] : vector<8x128xf32> to vector<128xf32>
    %33 = vector.shape_cast %32 : vector<128xf32> to vector<1x128xf32>
    %c0_16 = arith.constant 0 : index
    %34 = memref.load %arg7[%c0_16] : memref<1xf32, #tpu.memory_space<smem>>
    %35 = vector.broadcast %34 : f32 to vector<1x128xf32>
    %36 = arith.addf %33, %35 : vector<1x128xf32>
    %37 = arith.negf %36 : vector<1x128xf32>
    %38 = math.exp %37 : vector<1x128xf32>
    %cst_17 = arith.constant 1.000000e+00 : f32
    %39 = vector.broadcast %cst_17 : f32 to vector<1x128xf32>
    %40 = arith.addf %39, %38 : vector<1x128xf32>
    %41 = arith.divf %39, %40 : vector<1x128xf32>
    %c0_18 = arith.constant 0 : index
    %c0_19 = arith.constant 0 : index
    %42 = vector.load %arg8[%c0_18, %c0_19] : memref<1x128xf32, #tpu.memory_space<vmem>>, vector<1x128xf32>
    tpu.vector_store %arg8[%c0_18, %c0_19], %41 {strides = array<i32>} : memref<1x128xf32, #tpu.memory_space<vmem>>, vector<1x128xf32>,
    return
  }
  func.func @transform_0(%arg0: i32) -> (i32, i32, i32) {
    %c0_i32 = arith.constant 0 : i32
    %c0_i32_0 = arith.constant 0 : i32
    %c0_i32_1 = arith.constant 0 : i32
    return %arg0, %c0_i32, %c0_i32_0 : i32, i32, i32
  }
  func.func @transform_1(%arg0: i32) -> (i32, i32) {
    %c0_i32 = arith.constant 0 : i32
    %c0_i32_0 = arith.constant 0 : i32
    %c0_i32_1 = arith.constant 0 : i32
    return %c0_i32, %c0_i32_0 : i32, i32
  }
  func.func @transform_2(%arg0: i32) -> (i32, i32) {
    %c0_i32 = arith.constant 0 : i32
    %c0_i32_0 = arith.constant 0 : i32
    %c0_i32_1 = arith.constant 0 : i32
    return %c0_i32, %c0_i32_0 : i32, i32
  }
  func.func @transform_3(%arg0: i32) -> (i32, i32) {
    %c0_i32 = arith.constant 0 : i32
    %c0_i32_0 = arith.constant 0 : i32
    %c0_i32_1 = arith.constant 0 : i32
    return %c0_i32, %c0_i32_0 : i32, i32
  }
  func.func @transform_4(%arg0: i32) -> (i32, i32) {
    %c0_i32 = arith.constant 0 : i32
    %c0_i32_0 = arith.constant 0 : i32
    %c0_i32_1 = arith.constant 0 : i32
    return %c0_i32, %c0_i32_0 : i32, i32
  }
  func.func @transform_5(%arg0: i32) -> (i32, i32) {
    %c0_i32 = arith.constant 0 : i32
    %c0_i32_0 = arith.constant 0 : i32
    %c0_i32_1 = arith.constant 0 : i32
    return %c0_i32, %c0_i32_0 : i32, i32
  }
  func.func @transform_6(%arg0: i32) -> i32 {
    %c0_i32 = arith.constant 0 : i32
    %c0_i32_0 = arith.constant 0 : i32
    return %c0_i32 : i32
  }
  func.func @transform_7(%arg0: i32) -> (i32, i32) {
    %c0_i32 = arith.constant 0 : i32
    %c0_i32_0 = arith.constant 0 : i32
    return %c0_i32, %arg0 : i32, i32
  }
}

</mosaic_0001>

<llo_original>
// kernel: tpu_custom_call.1
$region0: #{tpu_custom_call.1}
  #allocation0 [shape = 'u32[]', space=smem, size = 0x4, offset = 0x4, fixed_abs, tag = 'smem constant byte address 0x4 - core index']
  #allocation1 [shape = 'u32[144,128]{1,0:T(1,128)}', space=vmem, size = 0x12000, scoped, tag = 'internal scratch']
  #allocation2 [shape = 'f32[1]{0:T(128)S(6)}', space=smem, size = 0x200, scoped, tag = 'scoped memory for tpu_custom_call.1']
  %s0 = inlined_call_operand.hbm [shape: bf16[1,16,896], index: 0, kind: input, shape index: {}]
  %s1 = inlined_call_operand.vmem [shape: bf16[16,16], index: 1, kind: input, shape index: {}]
  %s2 = inlined_call_operand.vmem [shape: f32[16,1], index: 2, kind: input, shape index: {}]
  %s3 = inlined_call_operand.vmem [shape: bf16[8,16], index: 3, kind: input, shape index: {}]
  %s4 = inlined_call_operand.vmem [shape: f32[8,1], index: 4, kind: input, shape index: {}]
  %s5 = inlined_call_operand.hbm [shape: f32[8,896], index: 5, kind: input, shape index: {}]
  %s6 = inlined_call_operand.<no memory space> [shape: f32[1], index: 6, kind: input, shape index: {}]
  %s7 = inlined_call_operand.hbm [shape: f32[1,128], index: 7, kind: output, shape index: {}]
  %s8 = sld [smem:[#allocation0]]
  $region46: #{tpu_custom_call.1} parent=0
    _
  %s10 = ssub.s32 1, %s8
  %s11 = scalar_select 0, %s10, %s8
  %12 = sst [smem:[#allocation2]] %s6
  $region1: #{tpu_custom_call.1} parent=0
    #allocation3 [shape = 'u8[28672]{0}', space=vmem, size = 0x7000, scoped, tag = 'input window, operand 0, single buffered']
    #allocation4 [shape = 's32[1]{0}', space=sflag, size = 0x4, scoped, tag = 'scoped memory for tpu_custom_call.1']
    #allocation5 [shape = 's32[1]{0}', space=sflag, size = 0x4, scoped, tag = 'scoped memory for tpu_custom_call.1']
    #allocation6 [shape = 'u8[28672]{0}', space=vmem, size = 0x7000, scoped, tag = 'input window, operand 5, single buffered']
    #allocation7 [shape = 's32[1]{0}', space=sflag, size = 0x4, scoped, tag = 'scoped memory for tpu_custom_call.1']
    #allocation8 [shape = 'u8[512]{0}', space=vmem, size = 0x400, scoped, tag = 'output window, operand 0, single buffered']
    %13 = vsyncpa [#allocation4], 0
    %14 = vsyncpa [#allocation7], 0
    %15 = vsyncpa [#allocation5], 0
    // Predicated region
    $region2: #{tpu_custom_call.1} parent=1 // pred_check
      _
    $region3: #{tpu_custom_call.1} parent=1 // pred_check_branch
      %17 = sbr.rel (0) target = $region5
    $region4: #{tpu_custom_call.1} parent=1 // pred_region
      %s19 = ssub.s32 896, 896
      %20 = vsyncadd [#allocation4], %s19
      %s21 = sshll.u32 [#allocation3], 4
      %s22 = int_to_ptr.vmem [resolvable:$true] %s21
      %27 = dma.hbm_to_vmem [thread:$0]  %s0, 896, %s22, [#allocation4], 448, 448, 28
    $region5: #{tpu_custom_call.1} parent=1 // pred_fallthru
      _
    // Predicated region
    $region6: #{tpu_custom_call.1} parent=1 // pred_check
      _
    $region7: #{tpu_custom_call.1} parent=1 // pred_check_branch
      %29 = sbr.rel (0) target = $region9
    $region8: #{tpu_custom_call.1} parent=1 // pred_region
      _
    $region9: #{tpu_custom_call.1} parent=1 // pred_fallthru
      _
    // Predicated region
    $region10: #{tpu_custom_call.1} parent=1 // pred_check
      _
    $region11: #{tpu_custom_call.1} parent=1 // pred_check_branch
      %31 = sbr.rel (0) target = $region13
    $region12: #{tpu_custom_call.1} parent=1 // pred_region
      _
    $region13: #{tpu_custom_call.1} parent=1 // pred_fallthru
      _
    // Predicated region
    $region14: #{tpu_custom_call.1} parent=1 // pred_check
      _
    $region15: #{tpu_custom_call.1} parent=1 // pred_check_branch
      %33 = sbr.rel (0) target = $region17
    $region16: #{tpu_custom_call.1} parent=1 // pred_region
      _
    $region17: #{tpu_custom_call.1} parent=1 // pred_fallthru
      _
    // Predicated region
    $region18: #{tpu_custom_call.1} parent=1 // pred_check
      _
    $region19: #{tpu_custom_call.1} parent=1 // pred_check_branch
      %35 = sbr.rel (0) target = $region21
    $region20: #{tpu_custom_call.1} parent=1 // pred_region
      _
    $region21: #{tpu_custom_call.1} parent=1 // pred_fallthru
      _
    // Predicated region
    $region22: #{tpu_custom_call.1} parent=1 // pred_check
      _
    $region23: #{tpu_custom_call.1} parent=1 // pred_check_branch
      %37 = sbr.rel (0) target = $region25
    $region24: #{tpu_custom_call.1} parent=1 // pred_region
      %s39 = ssub.s32 896, 896
      %40 = vsyncadd [#allocation7], %s39
      %s42 = sshll.u32 [#allocation6], 4
      %s43 = int_to_ptr.vmem [resolvable:$true] %s42
      %45 = dma.hbm_to_vmem [thread:$0]  %s5, 896, %s43, [#allocation7]
    $region25: #{tpu_custom_call.1} parent=1 // pred_fallthru
      _
    // Predicated region
    $region26: #{tpu_custom_call.1} parent=1 // pred_check
      _
    $region27: #{tpu_custom_call.1} parent=1 // pred_check_branch
      %47 = sbr.rel (0) target = $region29
    $region28: #{tpu_custom_call.1} parent=1 // pred_region
      _
    $region29: #{tpu_custom_call.1} parent=1 // pred_fallthru
      _
    // Predicated region
    $region30: #{tpu_custom_call.1} parent=1 // pred_check
      _
    $region31: #{tpu_custom_call.1} parent=1 // pred_check_branch
      %49 = sbr.rel (0) target = $region33
    $region32: #{tpu_custom_call.1} parent=1 // pred_region
      %50 = dma.done [#allocation4], 896
    $region33: #{tpu_custom_call.1} parent=1 // pred_fallthru
      _
    // Predicated region
    $region34: #{tpu_custom_call.1} parent=1 // pred_check
      _
    $region35: #{tpu_custom_call.1} parent=1 // pred_check_branch
      %52 = sbr.rel (0) target = $region37
    $region36: #{tpu_custom_call.1} parent=1 // pred_region
      %53 = dma.done [#allocation7], 896
    $region37: #{tpu_custom_call.1} parent=1 // pred_fallthru
      _
    %v55 = vld [vmem:[%s1] sm:$0xf]
    %v56 = vld [vmem:[%s1 + $0x4] sm:$0xf]
    %v57 = vld [vmem:[#allocation3] sm:$0xff]
    %v58 = vld [vmem:[#allocation3 + $0x8] sm:$0xff]
    %v59 = vld [vmem:[#allocation3 + $0x10] sm:$0xff]
    %v60 = vld [vmem:[#allocation3 + $0x18] sm:$0xf]
    %v61 = vld [vmem:[#allocation3 + $0x1c] sm:$0xff]
    %v62 = vld [vmem:[#allocation3 + $0x24] sm:$0xff]
    %v63 = vld [vmem:[#allocation3 + $0x2c] sm:$0xff]
    %v64 = vld [vmem:[#allocation3 + $0x34] sm:$0xf]
    %v65 = vld [vmem:[%s2] sm:$0xff]
    %v66 = vld [vmem:[%s2 + $0x8] sm:$0xff]
    %68 = vset.pattern.permute.xlu0 0
    %69 = vperm.xlu0 %68, %v65
    %v70 = vpop.permute.xlu0 %69
    %73 = vset.pattern.permute.xlu0 0
    %74 = vperm.xlu0 %73, %v66
    %v75 = vpop.permute.xlu0 %74
    %v79 = vunpack.c.l.b16 %v55
    %v80 = vunpack.c.l.b16 %v56
    %v81 = vpack.c.b16 %v80, %v79
    %v90 = vunpack.c.l.b16 %v57
    %v91 = vunpack.c.h.b16 %v57
    %v92 = vunpack.c.l.b16 %v58
    %v93 = vunpack.c.h.b16 %v58
    %v94 = vunpack.c.l.b16 %v59
    %v95 = vunpack.c.h.b16 %v59
    %v96 = vunpack.c.l.b16 %v60
    %v97 = vunpack.c.l.b16 %v61
    %v98 = vunpack.c.h.b16 %v61
    %v99 = vunpack.c.l.b16 %v62
    %v100 = vunpack.c.h.b16 %v62
    %v101 = vunpack.c.l.b16 %v63
    %v102 = vunpack.c.h.b16 %v63
    %v103 = vunpack.c.l.b16 %v64
    %v104 = vpack.c.b16 %v97, %v90
    %v105 = vpack.c.b16 %v98, %v91
    %v106 = vpack.c.b16 %v99, %v92
    %v107 = vpack.c.b16 %v100, %v93
    %v108 = vpack.c.b16 %v101, %v94
    %v109 = vpack.c.b16 %v102, %v95
    %v110 = vpack.c.b16 %v103, %v96
    %vm118 = vcmask 130048
    %v120 = vsel %vm118, %v81, 0
    %122 = vmatprep.subr.bf16.mxu0 0
    %123 = vmatpush1.bf16.msra.mxu0 0
    %124 = vmatprep.subr.bf16.mxu0 0
    %125 = vmatpush1.bf16.msra.mxu0 0
    %126 = vmatprep.subr.bf16.mxu0 0
    %127 = vmatpush1.bf16.msra.mxu0 0
    %128 = vmatprep.subr.bf16.mxu0 0
    %129 = vmatpush1.bf16.msra.mxu0 0
    %130 = vmatprep.subr.bf16.mxu0 0
    %131 = vmatpush1.bf16.msra.mxu0 0
    %132 = vmatprep.subr.bf16.mxu0 0
    %133 = vmatpush1.bf16.msra.mxu0 0
    %134 = vmatprep.subr.bf16.mxu0 0
    %135 = vmatpush1.bf16.msra.mxu0 0
    %136 = vmatprep.subr.bf16.mxu0 %v105
    %137 = vmatpush1.bf16.msra.mxu0 %v104
    %138 = vmatprep.subr.bf16.mxu0 0
    %139 = vmatpush2.bf16.msra.mxu0 0
    %140 = vmatprep.subr.bf16.mxu0 0
    %141 = vmatpush2.bf16.msra.mxu0 0
    %142 = vmatprep.subr.bf16.mxu0 0
    %143 = vmatpush2.bf16.msra.mxu0 0
    %144 = vmatprep.subr.bf16.mxu0 0
    %145 = vmatpush2.bf16.msra.mxu0 0
    %146 = vmatprep.subr.bf16.mxu0 0
    %147 = vmatpush2.bf16.msra.mxu0 0
    %148 = vmatprep.subr.bf16.mxu0 0
    %149 = vmatpush2.bf16.msra.mxu0 0
    %150 = vmatprep.subr.bf16.mxu0 0
    %151 = vmatpush2.bf16.msra.mxu0 0
    %152 = vmatprep.subr.bf16.mxu0 0
    %153 = vmatpush2.bf16.msra.mxu0 0
    %154 = vmatprep.mubr.bf16.mxu0 0
    %155 = vmatmul.mubr.bf16.gmra.mxu0 %v120
    %v156 = vpop.f32.mrf.mxu0
    %v157 = vadd.f32 %v70, %v156
    %v158 = vpop.f32.mrf.mxu0
    %v159 = vadd.f32 %v70, %v158
    %v160 = vpop.f32.mrf.mxu0
    %v161 = vadd.f32 %v75, %v160
    %v162 = vpop.f32.mrf.mxu0
    %v163 = vadd.f32 %v75, %v162
    %164 = vdwg.mxu0
    %165 = vmatprep.subr.bf16.mxu0 0
    %166 = vmatpush1.bf16.msra.mxu0 0
    %167 = vmatprep.subr.bf16.mxu0 0
    %168 = vmatpush1.bf16.msra.mxu0 0
    %169 = vmatprep.subr.bf16.mxu0 0
    %170 = vmatpush1.bf16.msra.mxu0 0
    %171 = vmatprep.subr.bf16.mxu0 0
    %172 = vmatpush1.bf16.msra.mxu0 0
    %173 = vmatprep.subr.bf16.mxu0 0
    %174 = vmatpush1.bf16.msra.mxu0 0
    %175 = vmatprep.subr.bf16.mxu0 0
    %176 = vmatpush1.bf16.msra.mxu0 0
    %177 = vmatprep.subr.bf16.mxu0 0
    %178 = vmatpush1.bf16.msra.mxu0 0
    %179 = vmatprep.subr.bf16.mxu0 %v107
    %180 = vmatpush1.bf16.msra.mxu0 %v106
    %181 = vmatprep.subr.bf16.mxu0 0
    %182 = vmatpush2.bf16.msra.mxu0 0
    %183 = vmatprep.subr.bf16.mxu0 0
    %184 = vmatpush2.bf16.msra.mxu0 0
    %185 = vmatprep.subr.bf16.mxu0 0
    %186 = vmatpush2.bf16.msra.mxu0 0
    %187 = vmatprep.subr.bf16.mxu0 0
    %188 = vmatpush2.bf16.msra.mxu0 0
    %189 = vmatprep.subr.bf16.mxu0 0
    %190 = vmatpush2.bf16.msra.mxu0 0
    %191 = vmatprep.subr.bf16.mxu0 0
    %192 = vmatpush2.bf16.msra.mxu0 0
    %193 = vmatprep.subr.bf16.mxu0 0
    %194 = vmatpush2.bf16.msra.mxu0 0
    %195 = vmatprep.subr.bf16.mxu0 0
    %196 = vmatpush2.bf16.msra.mxu0 0
    %197 = vmatprep.mubr.bf16.mxu0 0
    %198 = vmatmul.mubr.bf16.gmra.mxu0 %v120
    %v199 = vpop.f32.mrf.mxu0
    %v200 = vadd.f32 %v70, %v199
    %v201 = vpop.f32.mrf.mxu0
    %v202 = vadd.f32 %v70, %v201
    %v203 = vpop.f32.mrf.mxu0
    %v204 = vadd.f32 %v75, %v203
    %v205 = vpop.f32.mrf.mxu0
    %v206 = vadd.f32 %v75, %v205
    %207 = vdwg.mxu0
    %208 = vmatprep.subr.bf16.mxu0 0
    %209 = vmatpush1.bf16.msra.mxu0 0
    %210 = vmatprep.subr.bf16.mxu0 0
    %211 = vmatpush1.bf16.msra.mxu0 0
    %212 = vmatprep.subr.bf16.mxu0 0
    %213 = vmatpush1.bf16.msra.mxu0 0
    %214 = vmatprep.subr.bf16.mxu0 0
    %215 = vmatpush1.bf16.msra.mxu0 0
    %216 = vmatprep.subr.bf16.mxu0 0
    %217 = vmatpush1.bf16.msra.mxu0 0
    %218 = vmatprep.subr.bf16.mxu0 0
    %219 = vmatpush1.bf16.msra.mxu0 0
    %220 = vmatprep.subr.bf16.mxu0 0
    %221 = vmatpush1.bf16.msra.mxu0 0
    %222 = vmatprep.subr.bf16.mxu0 %v109
    %223 = vmatpush1.bf16.msra.mxu0 %v108
    %224 = vmatprep.subr.bf16.mxu0 0
    %225 = vmatpush2.bf16.msra.mxu0 0
    %226 = vmatprep.subr.bf16.mxu0 0
    %227 = vmatpush2.bf16.msra.mxu0 0
    %228 = vmatprep.subr.bf16.mxu0 0
    %229 = vmatpush2.bf16.msra.mxu0 0
    %230 = vmatprep.subr.bf16.mxu0 0
    %231 = vmatpush2.bf16.msra.mxu0 0
    %232 = vmatprep.subr.bf16.mxu0 0
    %233 = vmatpush2.bf16.msra.mxu0 0
    %234 = vmatprep.subr.bf16.mxu0 0
    %235 = vmatpush2.bf16.msra.mxu0 0
    %236 = vmatprep.subr.bf16.mxu0 0
    %237 = vmatpush2.bf16.msra.mxu0 0
    %238 = vmatprep.subr.bf16.mxu0 0
    %239 = vmatpush2.bf16.msra.mxu0 0
    %240 = vmatprep.mubr.bf16.mxu0 0
    %241 = vmatmul.mubr.bf16.gmra.mxu0 %v120
    %v242 = vpop.f32.mrf.mxu0
    %v243 = vadd.f32 %v70, %v242
    %v244 = vpop.f32.mrf.mxu0
    %v245 = vadd.f32 %v70, %v244
    %v246 = vpop.f32.mrf.mxu0
    %v247 = vadd.f32 %v75, %v246
    %v248 = vpop.f32.mrf.mxu0
    %v249 = vadd.f32 %v75, %v248
    %250 = vdwg.mxu0
    %251 = vmatprep.subr.bf16.mxu0 0
    %252 = vmatpush1.bf16.msra.mxu0 0
    %253 = vmatprep.subr.bf16.mxu0 0
    %254 = vmatpush1.bf16.msra.mxu0 0
    %255 = vmatprep.subr.bf16.mxu0 0
    %256 = vmatpush1.bf16.msra.mxu0 0
    %257 = vmatprep.subr.bf16.mxu0 0
    %258 = vmatpush1.bf16.msra.mxu0 0
    %259 = vmatprep.subr.bf16.mxu0 0
    %260 = vmatpush1.bf16.msra.mxu0 0
    %261 = vmatprep.subr.bf16.mxu0 0
    %262 = vmatpush1.bf16.msra.mxu0 0
    %263 = vmatprep.subr.bf16.mxu0 0
    %264 = vmatpush1.bf16.msra.mxu0 0
    %265 = vmatprep.subr.bf16.mxu0 0
    %266 = vmatpush1.bf16.msra.mxu0 %v110
    %267 = vmatprep.subr.bf16.mxu0 0
    %268 = vmatpush2.bf16.msra.mxu0 0
    %269 = vmatprep.subr.bf16.mxu0 0
    %270 = vmatpush2.bf16.msra.mxu0 0
    %271 = vmatprep.subr.bf16.mxu0 0
    %272 = vmatpush2.bf16.msra.mxu0 0
    %273 = vmatprep.subr.bf16.mxu0 0
    %274 = vmatpush2.bf16.msra.mxu0 0
    %275 = vmatprep.subr.bf16.mxu0 0
    %276 = vmatpush2.bf16.msra.mxu0 0
    %277 = vmatprep.subr.bf16.mxu0 0
    %278 = vmatpush2.bf16.msra.mxu0 0
    %279 = vmatprep.subr.bf16.mxu0 0
    %280 = vmatpush2.bf16.msra.mxu0 0
    %281 = vmatprep.subr.bf16.mxu0 0
    %282 = vmatpush2.bf16.msra.mxu0 0
    %283 = vmatprep.mubr.bf16.mxu0 0
    %284 = vmatmul.mubr.bf16.gmra.mxu0 %v120
    %v285 = vpop.f32.mrf.mxu0
    %v286 = vadd.f32 %v70, %v285
    %v287 = vpop.f32.mrf.mxu0
    %v288 = vpop.f32.mrf.mxu0
    %v289 = vadd.f32 %v75, %v288
    %v290 = vpop.f32.mrf.mxu0
    %291 = vdwg.mxu0
    %v292 = vmax.f32 %v157, 0.0
    %v293 = vmax.f32 %v159, 0.0
    %v294 = vmax.f32 %v200, 0.0
    %v295 = vmax.f32 %v202, 0.0
    %v296 = vmax.f32 %v243, 0.0
    %v297 = vmax.f32 %v245, 0.0
    %v298 = vmax.f32 %v286, 0.0
    %v299 = vmax.f32 %v161, 0.0
    %v300 = vmax.f32 %v163, 0.0
    %v301 = vmax.f32 %v204, 0.0
    %v302 = vmax.f32 %v206, 0.0
    %v303 = vmax.f32 %v247, 0.0
    %v304 = vmax.f32 %v249, 0.0
    %v305 = vmax.f32 %v289, 0.0
    %v306 = vld [vmem:[%s3] sm:$0xf]
    %v307 = vpack.c.bf16 %v299, %v292
    %v308 = vpack.c.bf16 %v300, %v293
    %v309 = vpack.c.bf16 %v301, %v294
    %v310 = vpack.c.bf16 %v302, %v295
    %v311 = vpack.c.bf16 %v303, %v296
    %v312 = vpack.c.bf16 %v304, %v297
    %v313 = vpack.c.bf16 %v305, %v298
    %v314 = vld [vmem:[%s4] sm:$0xff]
    %316 = vset.pattern.permute.xlu0 0
    %317 = vperm.xlu0 %316, %v314
    %v318 = vpop.permute.xlu0 %317
    %v321 = vsel %vm118, %v306, 0
    %323 = vmatprep.subr.bf16.mxu0 0
    %324 = vmatpush1.bf16.msra.mxu0 0
    %325 = vmatprep.subr.bf16.mxu0 0
    %326 = vmatpush1.bf16.msra.mxu0 0
    %327 = vmatprep.subr.bf16.mxu0 0
    %328 = vmatpush1.bf16.msra.mxu0 0
    %329 = vmatprep.subr.bf16.mxu0 0
    %330 = vmatpush1.bf16.msra.mxu0 0
    %331 = vmatprep.subr.bf16.mxu0 0
    %332 = vmatpush1.bf16.msra.mxu0 0
    %333 = vmatprep.subr.bf16.mxu0 0
    %334 = vmatpush1.bf16.msra.mxu0 0
    %335 = vmatprep.subr.bf16.mxu0 0
    %336 = vmatpush1.bf16.msra.mxu0 0
    %337 = vmatprep.subr.bf16.mxu0 %v308
    %338 = vmatpush1.bf16.msra.mxu0 %v307
    %339 = vmatprep.subr.bf16.mxu0 0
    %340 = vmatpush2.bf16.msra.mxu0 0
    %341 = vmatprep.subr.bf16.mxu0 0
    %342 = vmatpush2.bf16.msra.mxu0 0
    %343 = vmatprep.subr.bf16.mxu0 0
    %344 = vmatpush2.bf16.msra.mxu0 0
    %345 = vmatprep.subr.bf16.mxu0 0
    %346 = vmatpush2.bf16.msra.mxu0 0
    %347 = vmatprep.subr.bf16.mxu0 0
    %348 = vmatpush2.bf16.msra.mxu0 0
    %349 = vmatprep.subr.bf16.mxu0 0
    %350 = vmatpush2.bf16.msra.mxu0 0
    %351 = vmatprep.subr.bf16.mxu0 0
    %352 = vmatpush2.bf16.msra.mxu0 0
    %353 = vmatprep.subr.bf16.mxu0 0
    %354 = vmatpush2.bf16.msra.mxu0 0
    %355 = vmatprep.mubr.bf16.mxu0 0
    %356 = vmatmul.mubr.bf16.gmra.mxu0 %v321
    %v357 = vpop.f32.mrf.mxu0
    %v358 = vadd.f32 %v318, %v357
    %v359 = vpop.f32.mrf.mxu0
    %v360 = vadd.f32 %v318, %v359
    %v361 = vpop.f32.mrf.mxu0
    %v362 = vpop.f32.mrf.mxu0
    %363 = vdwg.mxu0
    %364 = vmatprep.subr.bf16.mxu0 0
    %365 = vmatpush1.bf16.msra.mxu0 0
    %366 = vmatprep.subr.bf16.mxu0 0
    %367 = vmatpush1.bf16.msra.mxu0 0
    %368 = vmatprep.subr.bf16.mxu0 0
    %369 = vmatpush1.bf16.msra.mxu0 0
    %370 = vmatprep.subr.bf16.mxu0 0
    %371 = vmatpush1.bf16.msra.mxu0 0
    %372 = vmatprep.subr.bf16.mxu0 0
    %373 = vmatpush1.bf16.msra.mxu0 0
    %374 = vmatprep.subr.bf16.mxu0 0
    %375 = vmatpush1.bf16.msra.mxu0 0
    %376 = vmatprep.subr.bf16.mxu0 0
    %377 = vmatpush1.bf16.msra.mxu0 0
    %378 = vmatprep.subr.bf16.mxu0 %v310
    %379 = vmatpush1.bf16.msra.mxu0 %v309
    %380 = vmatprep.subr.bf16.mxu0 0
    %381 = vmatpush2.bf16.msra.mxu0 0
    %382 = vmatprep.subr.bf16.mxu0 0
    %383 = vmatpush2.bf16.msra.mxu0 0
    %384 = vmatprep.subr.bf16.mxu0 0
    %385 = vmatpush2.bf16.msra.mxu0 0
    %386 = vmatprep.subr.bf16.mxu0 0
    %387 = vmatpush2.bf16.msra.mxu0 0
    %388 = vmatprep.subr.bf16.mxu0 0
    %389 = vmatpush2.bf16.msra.mxu0 0
    %390 = vmatprep.subr.bf16.mxu0 0
    %391 = vmatpush2.bf16.msra.mxu0 0
    %392 = vmatprep.subr.bf16.mxu0 0
    %393 = vmatpush2.bf16.msra.mxu0 0
    %394 = vmatprep.subr.bf16.mxu0 0
    %395 = vmatpush2.bf16.msra.mxu0 0
    %396 = vmatprep.mubr.bf16.mxu0 0
    %397 = vmatmul.mubr.bf16.gmra.mxu0 %v321
    %v398 = vpop.f32.mrf.mxu0
    %v399 = vadd.f32 %v318, %v398
    %v400 = vpop.f32.mrf.mxu0
    %v401 = vadd.f32 %v318, %v400
    %v402 = vpop.f32.mrf.mxu0
    %v403 = vpop.f32.mrf.mxu0
    %404 = vdwg.mxu0
    %405 = vmatprep.subr.bf16.mxu0 0
    %406 = vmatpush1.bf16.msra.mxu0 0
    %407 = vmatprep.subr.bf16.mxu0 0
    %408 = vmatpush1.bf16.msra.mxu0 0
    %409 = vmatprep.subr.bf16.mxu0 0
    %410 = vmatpush1.bf16.msra.mxu0 0
    %411 = vmatprep.subr.bf16.mxu0 0
    %412 = vmatpush1.bf16.msra.mxu0 0
    %413 = vmatprep.subr.bf16.mxu0 0
    %414 = vmatpush1.bf16.msra.mxu0 0
    %415 = vmatprep.subr.bf16.mxu0 0
    %416 = vmatpush1.bf16.msra.mxu0 0
    %417 = vmatprep.subr.bf16.mxu0 0
    %418 = vmatpush1.bf16.msra.mxu0 0
    %419 = vmatprep.subr.bf16.mxu0 %v312
    %420 = vmatpush1.bf16.msra.mxu0 %v311
    %421 = vmatprep.subr.bf16.mxu0 0
    %422 = vmatpush2.bf16.msra.mxu0 0
    %423 = vmatprep.subr.bf16.mxu0 0
    %424 = vmatpush2.bf16.msra.mxu0 0
    %425 = vmatprep.subr.bf16.mxu0 0
    %426 = vmatpush2.bf16.msra.mxu0 0
    %427 = vmatprep.subr.bf16.mxu0 0
    %428 = vmatpush2.bf16.msra.mxu0 0
    %429 = vmatprep.subr.bf16.mxu0 0
    %430 = vmatpush2.bf16.msra.mxu0 0
    %431 = vmatprep.subr.bf16.mxu0 0
    %432 = vmatpush2.bf16.msra.mxu0 0
    %433 = vmatprep.subr.bf16.mxu0 0
    %434 = vmatpush2.bf16.msra.mxu0 0
    %435 = vmatprep.subr.bf16.mxu0 0
    %436 = vmatpush2.bf16.msra.mxu0 0
    %437 = vmatprep.mubr.bf16.mxu0 0
    %438 = vmatmul.mubr.bf16.gmra.mxu0 %v321
    %v439 = vpop.f32.mrf.mxu0
    %v440 = vadd.f32 %v318, %v439
    %v441 = vpop.f32.mrf.mxu0
    %v442 = vadd.f32 %v318, %v441
    %v443 = vpop.f32.mrf.mxu0
    %v444 = vpop.f32.mrf.mxu0
    %445 = vdwg.mxu0
    %446 = vmatprep.subr.bf16.mxu0 0
    %447 = vmatpush1.bf16.msra.mxu0 0
    %448 = vmatprep.subr.bf16.mxu0 0
    %449 = vmatpush1.bf16.msra.mxu0 0
    %450 = vmatprep.subr.bf16.mxu0 0
    %451 = vmatpush1.bf16.msra.mxu0 0
    %452 = vmatprep.subr.bf16.mxu0 0
    %453 = vmatpush1.bf16.msra.mxu0 0
    %454 = vmatprep.subr.bf16.mxu0 0
    %455 = vmatpush1.bf16.msra.mxu0 0
    %456 = vmatprep.subr.bf16.mxu0 0
    %457 = vmatpush1.bf16.msra.mxu0 0
    %458 = vmatprep.subr.bf16.mxu0 0
    %459 = vmatpush1.bf16.msra.mxu0 0
    %460 = vmatprep.subr.bf16.mxu0 0
    %461 = vmatpush1.bf16.msra.mxu0 %v313
    %462 = vmatprep.subr.bf16.mxu0 0
    %463 = vmatpush2.bf16.msra.mxu0 0
    %464 = vmatprep.subr.bf16.mxu0 0
    %465 = vmatpush2.bf16.msra.mxu0 0
    %466 = vmatprep.subr.bf16.mxu0 0
    %467 = vmatpush2.bf16.msra.mxu0 0
    %468 = vmatprep.subr.bf16.mxu0 0
    %469 = vmatpush2.bf16.msra.mxu0 0
    %470 = vmatprep.subr.bf16.mxu0 0
    %471 = vmatpush2.bf16.msra.mxu0 0
    %472 = vmatprep.subr.bf16.mxu0 0
    %473 = vmatpush2.bf16.msra.mxu0 0
    %474 = vmatprep.subr.bf16.mxu0 0
    %475 = vmatpush2.bf16.msra.mxu0 0
    %476 = vmatprep.subr.bf16.mxu0 0
    %477 = vmatpush2.bf16.msra.mxu0 0
    %478 = vmatprep.mubr.bf16.mxu0 0
    %479 = vmatmul.mubr.bf16.gmra.mxu0 %v321
    %v480 = vpop.f32.mrf.mxu0
    %v481 = vadd.f32 %v318, %v480
    %v482 = vpop.f32.mrf.mxu0
    %v483 = vpop.f32.mrf.mxu0
    %v484 = vpop.f32.mrf.mxu0
    %485 = vdwg.mxu0
    %v486 = vmax.f32 %v358, 0.0
    %v487 = vmax.f32 %v360, 0.0
    %v488 = vmax.f32 %v399, 0.0
    %v489 = vmax.f32 %v401, 0.0
    %v490 = vmax.f32 %v440, 0.0
    %v491 = vmax.f32 %v442, 0.0
    %v492 = vmax.f32 %v481, 0.0
    %v493 = vld [vmem:[#allocation6] sm:$0xff]
    %v494 = vld [vmem:[#allocation6 + $0x8] sm:$0xff]
    %v495 = vld [vmem:[#allocation6 + $0x10] sm:$0xff]
    %v496 = vld [vmem:[#allocation6 + $0x18] sm:$0xff]
    %v497 = vld [vmem:[#allocation6 + $0x20] sm:$0xff]
    %v498 = vld [vmem:[#allocation6 + $0x28] sm:$0xff]
    %v499 = vld [vmem:[#allocation6 + $0x30] sm:$0xff]
    %v500 = vmul.f32 %v486, %v493
    %v501 = vmul.f32 %v487, %v494
    %v502 = vmul.f32 %v488, %v495
    %v503 = vmul.f32 %v489, %v496
    %v504 = vmul.f32 %v490, %v497
    %v505 = vmul.f32 %v491, %v498
    %v506 = vmul.f32 %v492, %v499
    %v507 = vadd.f32 %v500, %v501
    %v508 = vadd.f32 %v507, %v502
    %v509 = vadd.f32 %v508, %v503
    %v510 = vadd.f32 %v509, %v504
    %v511 = vadd.f32 %v510, %v505
    %v512 = vadd.f32 %v511, %v506
    %v513 = vrot.slane %v512, 4
    %v514 = vadd.f32 %v512, %v513
    %v515 = vrot.slane %v514, 2
    %v516 = vadd.f32 %v514, %v515
    %v517 = vrot.slane %v516, 1
    %v518 = vadd.f32 %v516, %v517
    %s519 = sld [smem:[#allocation2]]
    %v520 = vstv %s519
    %v521 = vadd.f32 %v518, %v520
    %v522 = vxor.u32 %v521, 2147483648
    %v523 = vmul.f32 %v522, 1.442695
    %v524 = vpow.pop %v523
    %v525 = vadd.f32 %v524, 1.0
    %v526 = vrcp.pop %v525
    %v527 = vmul.f32 1.0, %v526
    %528 = vst [vmem:[#allocation8] sm:$0x1] %v527
    // Predicated region
    $region38: #{tpu_custom_call.1} parent=1 // pred_check
      _
    $region39: #{tpu_custom_call.1} parent=1 // pred_check_branch
      %530 = sbr.rel (0) target = $region41
    $region40: #{tpu_custom_call.1} parent=1 // pred_region
      %s532 = ssub.s32 16, 16
      %533 = vsyncadd [#allocation5], %s532
      %s535 = sshll.u32 [#allocation8], 4
      %s536 = int_to_ptr.vmem [resolvable:$true] %s535
      %538 = dma.vmem_to_hbm [thread:$0]  %s536, 16, %s7, [#allocation5]
    $region41: #{tpu_custom_call.1} parent=1 // pred_fallthru
      _
    // Predicated region
    $region42: #{tpu_custom_call.1} parent=1 // pred_check
      _
    $region43: #{tpu_custom_call.1} parent=1 // pred_check_branch
      %540 = sbr.rel (0) target = $region45
    $region44: #{tpu_custom_call.1} parent=1 // pred_region
      %541 = dma.done [#allocation5], 16
    $region45: #{tpu_custom_call.1} parent=1 // pred_fallthru
      _
    %542 = vsyncpa [#allocation4], 1
    %543 = vsyncpa [#allocation7], 1
    %544 = vsyncpa [#allocation5], 1

</llo_original>
